<compile_context>
chip_gen: v5e
topology: v5e:2x2
jax: 0.10.0
libtpu: 0.0.40
codegen_flags: <defaults>
</compile_context>

<pallas_src>
import functools

import jax
import jax.numpy as jnp
from jax import lax
from jax.experimental import pallas as pl
from jax.experimental.pallas import tpu as pltpu


def _round_up(n, m):
    return -(-n // m) * m


def _fast_sigmoid(x):
    # Mathematically identical to sigmoid; one EUP tanh instead of exp + div.
    return 0.5 * (jnp.tanh(0.5 * x) + 1.0)


def _tpu_plan():
    """Per-generation (batch-tile cap, #tensorcores, epilogue dtype, vmem limit)."""
    kind = ""
    try:
        kind = jax.devices()[0].device_kind.lower()
    except Exception:
        pass
    if "v5" in kind:                      # no bf16 VPU/EUP; 16 MiB scoped default
        return 2048, 1, jnp.float32, 32 * 1024 * 1024
    if "v6" in kind:                      # 128 MiB VMEM, bf16 VPU/EUP
        return 4096, 1, jnp.bfloat16, 64 * 1024 * 1024
    if "v7" in kind or "7x" in kind:      # 64 MiB VMEM, 2 TensorCores
        return 4096, 2, jnp.bfloat16, 48 * 1024 * 1024
    return 2048, 1, jnp.float32, None     # unknown chip: conservative defaults


_TILE_CAP, _N_CORES, _EPI_DTYPE, _VMEM_LIMIT = _tpu_plan()


def _tile_plan(batch, cap, n_cores):
    """Pick (TB, B_pad): TB a multiple of 128 that divides B_pad >= batch.

    Prefers the fattest tile <= cap that (a) only pads the batch to the
    128-lane grain and (b) leaves at least `n_cores` grid steps so the
    "parallel" batch axis covers every TensorCore.  Falls back to a little
    extra batch padding when the 128-padded batch factorises awkwardly.
    """
    b128 = _round_up(batch, 128)
    n = b128 // 128
    cap_d = max(1, cap // 128)
    min_tiles = n_cores if n >= n_cores else 1

    best_d = 1
    for d in range(min(n, cap_d), 0, -1):
        if n % d == 0 and n // d >= min_tiles:
            best_d = d
            break
    ideal_d = min(cap_d, max(1, n // min_tiles))
    if best_d * 4 < ideal_d:              # awkward (e.g. prime) factorisation:
        best_d = ideal_d                  # pad a bit more, keep the tile fat
    tb = best_d * 128
    return tb, _round_up(b128, tb)


def _mlp_kernel(x_ref, w1_ref, b1_ref, w2_ref, b2_ref,
                w3_ref, b3_ref, w4_ref, b4_ref, o_ref, *, epi_dtype):
    # x_ref: (TB, 7) f32 row-major block, straight from the caller's layout.
    # Contract its feature dim against W1's `in` dim so activations come out
    # feature-major (140, TB): hidden dim on sublanes, batch lane-dense.
    x = x_ref[...].astype(jnp.bfloat16)                            # (TB, 7)
    acc = lax.dot_general(w1_ref[...], x,
                          dimension_numbers=(((1,), (1,)), ((), ())),
                          preferred_element_type=jnp.float32)      # (140, TB)
    h = _fast_sigmoid(acc.astype(epi_dtype) + b1_ref[...])

    for w_ref, b_ref in ((w2_ref, b2_ref), (w3_ref, b3_ref), (w4_ref, b4_ref)):
        acc = jnp.dot(w_ref[...], h.astype(jnp.bfloat16),
                      preferred_element_type=jnp.float32)
        h = _fast_sigmoid(acc.astype(epi_dtype) + b_ref[...])

    o_ref[...] = h.astype(o_ref.dtype)                             # (1, TB)


@jax.jit
def net_forward(x, params):
    """x: (B, 7) float32 -> (B, 1) float32 (matches Net.forward)."""
    B, F = x.shape
    TB, B_pad = _tile_plan(B, _TILE_CAP, _N_CORES)
    nb = B_pad // TB

    if B_pad != B:                        # pad batch only up to the 128 grain
        x = jnp.pad(x, ((0, B_pad - B), (0, 0)))

    epi = _EPI_DTYPE
    w1, b1 = params["w1"], params["b1"].astype(epi)
    w2, b2 = params["w2"], params["b2"].astype(epi)
    w3, b3 = params["w3"], params["b3"].astype(epi)
    w4, b4 = params["w4"], params["b4"].astype(epi)

    resident = lambda a: pl.BlockSpec(a.shape, lambda i: (0, 0))   # DMA'd once

    out = pl.pallas_call(
        functools.partial(_mlp_kernel, epi_dtype=epi),
        out_shape=jax.ShapeDtypeStruct((1, B_pad), jnp.float32),
        grid=(nb,),
        in_specs=[
            pl.BlockSpec((TB, F), lambda i: (i, 0)),
            resident(w1), resident(b1),
            resident(w2), resident(b2),
            resident(w3), resident(b3),
            resident(w4), resident(b4),
        ],
        out_specs=pl.BlockSpec((1, TB), lambda i: (0, i)),
        compiler_params=pltpu.CompilerParams(
            dimension_semantics=("parallel",),
            vmem_limit_bytes=_VMEM_LIMIT),
    )(x, w1, b1, w2, b2, w3, b3, w4, b4)

    return out[:, :B].reshape(B, 1)


def init_params(key):
    """Mirror nn.Linear default init: uniform(-1/sqrt(fan_in), 1/sqrt(fan_in)).

    Weights stored (out, in) as bf16 (MXU operands); biases (out, 1) f32.
    """
    dims = [(7, 140), (140, 140), (140, 140), (140, 1)]
    params = {}
    for i, (fan_in, fan_out) in enumerate(dims, start=1):
        key, kw, kb = jax.random.split(key, 3)
        bound = 1.0 / (fan_in ** 0.5)
        w = jax.random.uniform(kw, (fan_out, fan_in), jnp.float32, -bound, bound)
        b = jax.random.uniform(kb, (fan_out, 1), jnp.float32, -bound, bound)
        params[f"w{i}"] = w.astype(jnp.bfloat16)
        params[f"b{i}"] = b
    return params


def _reference_forward(x, params, epi_dtype):
    """Pure-JAX reference using the same bf16-matmul / epilogue recipe."""
    h = x
    for i in range(1, 5):
        w = params[f"w{i}"]                        # (out, in) bf16
        b = params[f"b{i}"].astype(epi_dtype)      # (out, 1)
        pre = jnp.dot(h.astype(jnp.bfloat16), w.T,
                      preferred_element_type=jnp.float32)
        h = _fast_sigmoid(pre.astype(epi_dtype) + b.T)
    return h.astype(jnp.float32)                   # (B, 1)


if __name__ == "__main__":
    key = jax.random.PRNGKey(0)
    key_p, key_x = jax.random.split(key)

    params = init_params(key_p)
    tol = 2e-2 if _EPI_DTYPE == jnp.bfloat16 else 2e-3

    # Small demo batch (B=8, in_features=7), plus a 128-multiple batch that
    # exercises the tiled (and on v7x multi-core) grid path.
    for batch in (8, 384):
        kx = jax.random.fold_in(key_x, batch)
        x = jax.random.normal(kx, (batch, 7), jnp.float32)

        out = jax.block_until_ready(net_forward(x, params))
        ref = _reference_forward(x, params, _EPI_DTYPE)

        assert out.shape == (batch, 1), out.shape
        err = float(jnp.max(jnp.abs(out - ref)))
        assert err < tol, err

    print("KERNEL_OK")
</pallas_src>

<mosaic_0001>
module attributes {stable_mosaic.version = 11 : i64} {
  func.func @_mlp_kernel(%arg0: i32, %arg1: memref<128x7xf32, #tpu.memory_space<vmem>>, %arg2: memref<140x7xbf16, #tpu.memory_space<vmem>>, %arg3: memref<140x1xf32, #tpu.memory_space<vmem>>, %arg4: memref<140x140xbf16, #tpu.memory_space<vmem>>, %arg5: memref<140x1xf32, #tpu.memory_space<vmem>>, %arg6: memref<140x140xbf16, #tpu.memory_space<vmem>>, %arg7: memref<140x1xf32, #tpu.memory_space<vmem>>, %arg8: memref<1x140xbf16, #tpu.memory_space<vmem>>, %arg9: memref<1x1xf32, #tpu.memory_space<vmem>>, %arg10: memref<1x128xf32, #tpu.memory_space<vmem>>) attributes {dimension_semantics = [#tpu.dimension_semantics<parallel>], iteration_bounds = array<i64: 1>, scalar_prefetch = 0 : i64, scratch_operands = 0 : i64, tpu.core_type = #tpu.core_type<tc>, window_params = [{transform_indices = @transform_0, window_bounds = array<i64: 128, 7>}, {pipeline_mode = #tpu.pipeline_mode<synchronous>, transform_indices = @transform_1, window_bounds = array<i64: 140, 7>}, {pipeline_mode = #tpu.pipeline_mode<synchronous>, transform_indices = @transform_2, window_bounds = array<i64: 140, 1>}, {pipeline_mode = #tpu.pipeline_mode<synchronous>, transform_indices = @transform_3, window_bounds = array<i64: 140, 140>}, {pipeline_mode = #tpu.pipeline_mode<synchronous>, transform_indices = @transform_4, window_bounds = array<i64: 140, 1>}, {pipeline_mode = #tpu.pipeline_mode<synchronous>, transform_indices = @transform_5, window_bounds = array<i64: 140, 140>}, {pipeline_mode = #tpu.pipeline_mode<synchronous>, transform_indices = @transform_6, window_bounds = array<i64: 140, 1>}, {pipeline_mode = #tpu.pipeline_mode<synchronous>, transform_indices = @transform_7, window_bounds = array<i64: 1, 140>}, {pipeline_mode = #tpu.pipeline_mode<synchronous>, transform_indices = @transform_8, window_bounds = array<i64: 1, 1>}, {transform_indices = @transform_9, window_bounds = array<i64: 1, 128>}]} {
    %c0 = arith.constant 0 : index
    %c0_0 = arith.constant 0 : index
    %0 = vector.load %arg1[%c0, %c0_0] : memref<128x7xf32, #tpu.memory_space<vmem>>, vector<128x7xf32>
    %1 = arith.truncf %0 : vector<128x7xf32> to vector<128x7xbf16>
    %c0_1 = arith.constant 0 : index
    %c0_2 = arith.constant 0 : index
    %2 = vector.load %arg2[%c0_1, %c0_2] : memref<140x7xbf16, #tpu.memory_space<vmem>>, vector<140x7xbf16>
    %cst = arith.constant dense<0.000000e+00> : vector<140x128xf32>
    %3 = tpu.matmul %2, %1, %cst {dimension_numbers = #tpu.dot_dimension_numbers<[1], [1], [0], [0], [0, 0, 1, 0], [], []>} : vector<140x7xbf16>, vector<128x7xbf16>, vector<140x128xf32> -> vector<140x128xf32>
    %c0_3 = arith.constant 0 : index
    %c0_4 = arith.constant 0 : index
    %4 = vector.load %arg3[%c0_3, %c0_4] : memref<140x1xf32, #tpu.memory_space<vmem>>, vector<140x1xf32>
    %5 = vector.broadcast %4 : vector<140x1xf32> to vector<140x128xf32>
    %6 = arith.addf %3, %5 : vector<140x128xf32>
    %cst_5 = arith.constant 5.000000e-01 : f32
    %7 = vector.broadcast %cst_5 : f32 to vector<140x128xf32>
    %8 = arith.mulf %7, %6 : vector<140x128xf32>
    %9 = math.tanh %8 : vector<140x128xf32>
    %cst_6 = arith.constant 1.000000e+00 : f32
    %10 = vector.broadcast %cst_6 : f32 to vector<140x128xf32>
    %11 = arith.addf %9, %10 : vector<140x128xf32>
    %cst_7 = arith.constant 5.000000e-01 : f32
    %12 = vector.broadcast %cst_7 : f32 to vector<140x128xf32>
    %13 = arith.mulf %12, %11 : vector<140x128xf32>
    %c0_8 = arith.constant 0 : index
    %c0_9 = arith.constant 0 : index
    %14 = vector.load %arg4[%c0_8, %c0_9] : memref<140x140xbf16, #tpu.memory_space<vmem>>, vector<140x140xbf16>
    %15 = arith.truncf %13 : vector<140x128xf32> to vector<140x128xbf16>
    %cst_10 = arith.constant dense<0.000000e+00> : vector<140x128xf32>
    %16 = tpu.matmul %14, %15, %cst_10 {dimension_numbers = #tpu.dot_dimension_numbers<[1], [0], [0], [1], [0, 0, 1, 1], [], []>} : vector<140x140xbf16>, vector<140x128xbf16>, vector<140x128xf32> -> vector<140x128xf32>
    %c0_11 = arith.constant 0 : index
    %c0_12 = arith.constant 0 : index
    %17 = vector.load %arg5[%c0_11, %c0_12] : memref<140x1xf32, #tpu.memory_space<vmem>>, vector<140x1xf32>
    %18 = vector.broadcast %17 : vector<140x1xf32> to vector<140x128xf32>
    %19 = arith.addf %16, %18 : vector<140x128xf32>
    %cst_13 = arith.constant 5.000000e-01 : f32
    %20 = vector.broadcast %cst_13 : f32 to vector<140x128xf32>
    %21 = arith.mulf %20, %19 : vector<140x128xf32>
    %22 = math.tanh %21 : vector<140x128xf32>
    %cst_14 = arith.constant 1.000000e+00 : f32
    %23 = vector.broadcast %cst_14 : f32 to vector<140x128xf32>
    %24 = arith.addf %22, %23 : vector<140x128xf32>
    %cst_15 = arith.constant 5.000000e-01 : f32
    %25 = vector.broadcast %cst_15 : f32 to vector<140x128xf32>
    %26 = arith.mulf %25, %24 : vector<140x128xf32>
    %c0_16 = arith.constant 0 : index
    %c0_17 = arith.constant 0 : index
    %27 = vector.load %arg6[%c0_16, %c0_17] : memref<140x140xbf16, #tpu.memory_space<vmem>>, vector<140x140xbf16>
    %28 = arith.truncf %26 : vector<140x128xf32> to vector<140x128xbf16>
    %cst_18 = arith.constant dense<0.000000e+00> : vector<140x128xf32>
    %29 = tpu.matmul %27, %28, %cst_18 {dimension_numbers = #tpu.dot_dimension_numbers<[1], [0], [0], [1], [0, 0, 1, 1], [], []>} : vector<140x140xbf16>, vector<140x128xbf16>, vector<140x128xf32> -> vector<140x128xf32>
    %c0_19 = arith.constant 0 : index
    %c0_20 = arith.constant 0 : index
    %30 = vector.load %arg7[%c0_19, %c0_20] : memref<140x1xf32, #tpu.memory_space<vmem>>, vector<140x1xf32>
    %31 = vector.broadcast %30 : vector<140x1xf32> to vector<140x128xf32>
    %32 = arith.addf %29, %31 : vector<140x128xf32>
    %cst_21 = arith.constant 5.000000e-01 : f32
    %33 = vector.broadcast %cst_21 : f32 to vector<140x128xf32>
    %34 = arith.mulf %33, %32 : vector<140x128xf32>
    %35 = math.tanh %34 : vector<140x128xf32>
    %cst_22 = arith.constant 1.000000e+00 : f32
    %36 = vector.broadcast %cst_22 : f32 to vector<140x128xf32>
    %37 = arith.addf %35, %36 : vector<140x128xf32>
    %cst_23 = arith.constant 5.000000e-01 : f32
    %38 = vector.broadcast %cst_23 : f32 to vector<140x128xf32>
    %39 = arith.mulf %38, %37 : vector<140x128xf32>
    %c0_24 = arith.constant 0 : index
    %c0_25 = arith.constant 0 : index
    %40 = vector.load %arg8[%c0_24, %c0_25] : memref<1x140xbf16, #tpu.memory_space<vmem>>, vector<1x140xbf16>
    %41 = arith.truncf %39 : vector<140x128xf32> to vector<140x128xbf16>
    %cst_26 = arith.constant dense<0.000000e+00> : vector<1x128xf32>
    %42 = tpu.matmul %40, %41, %cst_26 {dimension_numbers = #tpu.dot_dimension_numbers<[1], [0], [0], [1], [0, 0, 1, 1], [], []>} : vector<1x140xbf16>, vector<140x128xbf16>, vector<1x128xf32> -> vector<1x128xf32>
    %c0_27 = arith.constant 0 : index
    %c0_28 = arith.constant 0 : index
    %43 = vector.load %arg9[%c0_27, %c0_28] : memref<1x1xf32, #tpu.memory_space<vmem>>, vector<1x1xf32>
    %44 = vector.broadcast %43 : vector<1x1xf32> to vector<1x128xf32>
    %45 = arith.addf %42, %44 : vector<1x128xf32>
    %cst_29 = arith.constant 5.000000e-01 : f32
    %46 = vector.broadcast %cst_29 : f32 to vector<1x128xf32>
    %47 = arith.mulf %46, %45 : vector<1x128xf32>
    %48 = math.tanh %47 : vector<1x128xf32>
    %cst_30 = arith.constant 1.000000e+00 : f32
    %49 = vector.broadcast %cst_30 : f32 to vector<1x128xf32>
    %50 = arith.addf %48, %49 : vector<1x128xf32>
    %cst_31 = arith.constant 5.000000e-01 : f32
    %51 = vector.broadcast %cst_31 : f32 to vector<1x128xf32>
    %52 = arith.mulf %51, %50 : vector<1x128xf32>
    %c0_32 = arith.constant 0 : index
    %c0_33 = arith.constant 0 : index
    %53 = vector.load %arg10[%c0_32, %c0_33] : memref<1x128xf32, #tpu.memory_space<vmem>>, vector<1x128xf32>
    tpu.vector_store %arg10[%c0_32, %c0_33], %52 {strides = array<i32>} : memref<1x128xf32, #tpu.memory_space<vmem>>, vector<1x128xf32>,
    return
  }
  func.func @transform_0(%arg0: i32) -> (i32, i32) {
    %c0_i32 = arith.constant 0 : i32
    %c0_i32_0 = arith.constant 0 : i32
    return %arg0, %c0_i32 : i32, i32
  }
  func.func @transform_1(%arg0: i32) -> (i32, i32) {
    %c0_i32 = arith.constant 0 : i32
    %c0_i32_0 = arith.constant 0 : i32
    %c0_i32_1 = arith.constant 0 : i32
    return %c0_i32, %c0_i32_0 : i32, i32
  }
  func.func @transform_2(%arg0: i32) -> (i32, i32) {
    %c0_i32 = arith.constant 0 : i32
    %c0_i32_0 = arith.constant 0 : i32
    %c0_i32_1 = arith.constant 0 : i32
    return %c0_i32, %c0_i32_0 : i32, i32
  }
  func.func @transform_3(%arg0: i32) -> (i32, i32) {
    %c0_i32 = arith.constant 0 : i32
    %c0_i32_0 = arith.constant 0 : i32
    %c0_i32_1 = arith.constant 0 : i32
    return %c0_i32, %c0_i32_0 : i32, i32
  }
  func.func @transform_4(%arg0: i32) -> (i32, i32) {
    %c0_i32 = arith.constant 0 : i32
    %c0_i32_0 = arith.constant 0 : i32
    %c0_i32_1 = arith.constant 0 : i32
    return %c0_i32, %c0_i32_0 : i32, i32
  }
  func.func @transform_5(%arg0: i32) -> (i32, i32) {
    %c0_i32 = arith.constant 0 : i32
    %c0_i32_0 = arith.constant 0 : i32
    %c0_i32_1 = arith.constant 0 : i32
    return %c0_i32, %c0_i32_0 : i32, i32
  }
  func.func @transform_6(%arg0: i32) -> (i32, i32) {
    %c0_i32 = arith.constant 0 : i32
    %c0_i32_0 = arith.constant 0 : i32
    %c0_i32_1 = arith.constant 0 : i32
    return %c0_i32, %c0_i32_0 : i32, i32
  }
  func.func @transform_7(%arg0: i32) -> (i32, i32) {
    %c0_i32 = arith.constant 0 : i32
    %c0_i32_0 = arith.constant 0 : i32
    %c0_i32_1 = arith.constant 0 : i32
    return %c0_i32, %c0_i32_0 : i32, i32
  }
  func.func @transform_8(%arg0: i32) -> (i32, i32) {
    %c0_i32 = arith.constant 0 : i32
    %c0_i32_0 = arith.constant 0 : i32
    %c0_i32_1 = arith.constant 0 : i32
    return %c0_i32, %c0_i32_0 : i32, i32
  }
  func.func @transform_9(%arg0: i32) -> (i32, i32) {
    %c0_i32 = arith.constant 0 : i32
    %c0_i32_0 = arith.constant 0 : i32
    return %c0_i32, %arg0 : i32, i32
  }
}

</mosaic_0001>

<llo_original>
// kernel: net_forward.1
$region0: #{net_forward.1}
  #allocation0 [shape = 'u32[]', space=smem, size = 0x4, offset = 0x4, fixed_abs, tag = 'smem constant byte address 0x4 - core index']
  #allocation1 [shape = 'u32[72,128]{1,0:T(1,128)}', space=vmem, size = 0x9000, scoped, tag = 'internal scratch']
  #allocation2 [shape = 'f32[1,1]{1,0:T(1,128)S(1)}', space=vmem, size = 0x200, scoped, tag = 'scoped memory for net_forward.1']
  %s0 = inlined_call_operand.vmem [shape: f32[128,7], index: 0, kind: input, shape index: {}]
  %s1 = inlined_call_operand.vmem [shape: bf16[140,7], index: 1, kind: input, shape index: {}]
  %s2 = inlined_call_operand.vmem [shape: f32[140,1], index: 2, kind: input, shape index: {}]
  %s3 = inlined_call_operand.vmem [shape: bf16[140,140], index: 3, kind: input, shape index: {}]
  %s4 = inlined_call_operand.vmem [shape: f32[140,1], index: 4, kind: input, shape index: {}]
  %s5 = inlined_call_operand.vmem [shape: bf16[140,140], index: 5, kind: input, shape index: {}]
  %s6 = inlined_call_operand.vmem [shape: f32[140,1], index: 6, kind: input, shape index: {}]
  %s7 = inlined_call_operand.vmem [shape: bf16[1,140], index: 7, kind: input, shape index: {}]
  %s8 = inlined_call_operand.<no memory space> [shape: f32[1,1], index: 8, kind: input, shape index: {}]
  %s9 = inlined_call_operand.vmem [shape: f32[1,128], index: 9, kind: output, shape index: {}]
  %s10 = sld [smem:[#allocation0]]
  $region46: #{net_forward.1} parent=0
    _
  %s12 = ssub.s32 1, %s10
  %s13 = scalar_select 0, %s12, %s10
  %v14 = vstv %s8
  %15 = vst [vmem:[#allocation2] sm:$0x1] %v14
  // Predicated region
  $region2: #{net_forward.1} parent=0 // pred_check
    _
  $region3: #{net_forward.1} parent=0 // pred_check_branch
    %17 = sbr.rel (0) target = $region5
  $region4: #{net_forward.1} parent=0 // pred_region
    _
  $region5: #{net_forward.1} parent=0 // pred_fallthru
    _
  // Predicated region
  $region6: #{net_forward.1} parent=0 // pred_check
    _
  $region7: #{net_forward.1} parent=0 // pred_check_branch
    %19 = sbr.rel (0) target = $region9
  $region8: #{net_forward.1} parent=0 // pred_region
    _
  $region9: #{net_forward.1} parent=0 // pred_fallthru
    _
  // Predicated region
  $region10: #{net_forward.1} parent=0 // pred_check
    _
  $region11: #{net_forward.1} parent=0 // pred_check_branch
    %21 = sbr.rel (0) target = $region13
  $region12: #{net_forward.1} parent=0 // pred_region
    _
  $region13: #{net_forward.1} parent=0 // pred_fallthru
    _
  // Predicated region
  $region14: #{net_forward.1} parent=0 // pred_check
    _
  $region15: #{net_forward.1} parent=0 // pred_check_branch
    %23 = sbr.rel (0) target = $region17
  $region16: #{net_forward.1} parent=0 // pred_region
    _
  $region17: #{net_forward.1} parent=0 // pred_fallthru
    _
  // Predicated region
  $region18: #{net_forward.1} parent=0 // pred_check
    _
  $region19: #{net_forward.1} parent=0 // pred_check_branch
    %25 = sbr.rel (0) target = $region21
  $region20: #{net_forward.1} parent=0 // pred_region
    _
  $region21: #{net_forward.1} parent=0 // pred_fallthru
    _
  // Predicated region
  $region22: #{net_forward.1} parent=0 // pred_check
    _
  $region23: #{net_forward.1} parent=0 // pred_check_branch
    %27 = sbr.rel (0) target = $region25
  $region24: #{net_forward.1} parent=0 // pred_region
    _
  $region25: #{net_forward.1} parent=0 // pred_fallthru
    _
  // Predicated region
  $region26: #{net_forward.1} parent=0 // pred_check
    _
  $region27: #{net_forward.1} parent=0 // pred_check_branch
    %29 = sbr.rel (0) target = $region29
  $region28: #{net_forward.1} parent=0 // pred_region
    _
  $region29: #{net_forward.1} parent=0 // pred_fallthru
    _
  // Predicated region
  $region30: #{net_forward.1} parent=0 // pred_check
    _
  $region31: #{net_forward.1} parent=0 // pred_check_branch
    %31 = sbr.rel (0) target = $region33
  $region32: #{net_forward.1} parent=0 // pred_region
    _
  $region33: #{net_forward.1} parent=0 // pred_fallthru
    _
  // Predicated region
  $region34: #{net_forward.1} parent=0 // pred_check
    _
  $region35: #{net_forward.1} parent=0 // pred_check_branch
    %33 = sbr.rel (0) target = $region37
  $region36: #{net_forward.1} parent=0 // pred_region
    _
  $region37: #{net_forward.1} parent=0 // pred_fallthru
    _
  %v35 = vld [vmem:[%s0] sm:$0xff]
  %v36 = vld [vmem:[%s0 + $0x8] sm:$0xff]
  %v37 = vld [vmem:[%s0 + $0x10] sm:$0xff]
  %v38 = vld [vmem:[%s0 + $0x18] sm:$0xff]
  %v39 = vld [vmem:[%s0 + $0x20] sm:$0xff]
  %v40 = vld [vmem:[%s0 + $0x28] sm:$0xff]
  %v41 = vld [vmem:[%s0 + $0x30] sm:$0xff]
  %v42 = vld [vmem:[%s0 + $0x38] sm:$0xff]
  %v43 = vld [vmem:[%s0 + $0x40] sm:$0xff]
  %v44 = vld [vmem:[%s0 + $0x48] sm:$0xff]
  %v45 = vld [vmem:[%s0 + $0x50] sm:$0xff]
  %v46 = vld [vmem:[%s0 + $0x58] sm:$0xff]
  %v47 = vld [vmem:[%s0 + $0x60] sm:$0xff]
  %v48 = vld [vmem:[%s0 + $0x68] sm:$0xff]
  %v49 = vld [vmem:[%s0 + $0x70] sm:$0xff]
  %v50 = vld [vmem:[%s0 + $0x78] sm:$0xff]
  %v51 = vpack.c.bf16 %v36, %v35
  %v52 = vpack.c.bf16 %v38, %v37
  %v53 = vpack.c.bf16 %v40, %v39
  %v54 = vpack.c.bf16 %v42, %v41
  %v55 = vpack.c.bf16 %v44, %v43
  %v56 = vpack.c.bf16 %v46, %v45
  %v57 = vpack.c.bf16 %v48, %v47
  %v58 = vpack.c.bf16 %v50, %v49
  %v59 = vld [vmem:[%s1] sm:$0xf]
  %v60 = vld [vmem:[%s1 + $0x4] sm:$0xf]
  %v61 = vld [vmem:[%s1 + $0x8] sm:$0xf]
  %v62 = vld [vmem:[%s1 + $0xc] sm:$0xf]
  %v63 = vld [vmem:[%s1 + $0x10] sm:$0xf]
  %v64 = vld [vmem:[%s1 + $0x14] sm:$0xf]
  %v65 = vld [vmem:[%s1 + $0x18] sm:$0xf]
  %v66 = vld [vmem:[%s1 + $0x1c] sm:$0xf]
  %v67 = vld [vmem:[%s1 + $0x20] sm:$0xf]
  %v68 = vld [vmem:[%s1 + $0x24] sm:$0xf]
  %v69 = vld [vmem:[%s1 + $0x28] sm:$0xf]
  %v70 = vld [vmem:[%s1 + $0x2c] sm:$0xf]
  %v71 = vld [vmem:[%s1 + $0x30] sm:$0xf]
  %v72 = vld [vmem:[%s1 + $0x34] sm:$0xf]
  %v73 = vld [vmem:[%s1 + $0x38] sm:$0xf]
  %v74 = vld [vmem:[%s1 + $0x3c] sm:$0xf]
  %v75 = vld [vmem:[%s1 + $0x40] sm:$0xf]
  %v76 = vld [vmem:[%s1 + $0x44] sm:$0x3]
  %v77 = vld [vmem:[%s2] sm:$0xff]
  %v78 = vld [vmem:[%s2 + $0x8] sm:$0xff]
  %v79 = vld [vmem:[%s2 + $0x10] sm:$0xff]
  %v80 = vld [vmem:[%s2 + $0x18] sm:$0xff]
  %v81 = vld [vmem:[%s2 + $0x20] sm:$0xff]
  %v82 = vld [vmem:[%s2 + $0x28] sm:$0xff]
  %v83 = vld [vmem:[%s2 + $0x30] sm:$0xff]
  %v84 = vld [vmem:[%s2 + $0x38] sm:$0xff]
  %v85 = vld [vmem:[%s2 + $0x40] sm:$0xff]
  %v86 = vld [vmem:[%s2 + $0x48] sm:$0xff]
  %v87 = vld [vmem:[%s2 + $0x50] sm:$0xff]
  %v88 = vld [vmem:[%s2 + $0x58] sm:$0xff]
  %v89 = vld [vmem:[%s2 + $0x60] sm:$0xff]
  %v90 = vld [vmem:[%s2 + $0x68] sm:$0xff]
  %v91 = vld [vmem:[%s2 + $0x70] sm:$0xff]
  %v92 = vld [vmem:[%s2 + $0x78] sm:$0xff]
  %v93 = vld [vmem:[%s2 + $0x80] sm:$0xff]
  %v94 = vld [vmem:[%s2 + $0x88] sm:$0xf]
  %96 = vset.pattern.permute.xlu0 0
  %97 = vperm.xlu0 %96, %v77
  %v98 = vpop.permute.xlu0 %97
  %101 = vset.pattern.permute.xlu0 0
  %102 = vperm.xlu0 %101, %v78
  %v103 = vpop.permute.xlu0 %102
  %106 = vset.pattern.permute.xlu0 0
  %107 = vperm.xlu0 %106, %v79
  %v108 = vpop.permute.xlu0 %107
  %111 = vset.pattern.permute.xlu0 0
  %112 = vperm.xlu0 %111, %v80
  %v113 = vpop.permute.xlu0 %112
  %116 = vset.pattern.permute.xlu0 0
  %117 = vperm.xlu0 %116, %v81
  %v118 = vpop.permute.xlu0 %117
  %121 = vset.pattern.permute.xlu0 0
  %122 = vperm.xlu0 %121, %v82
  %v123 = vpop.permute.xlu0 %122
  %126 = vset.pattern.permute.xlu0 0
  %127 = vperm.xlu0 %126, %v83
  %v128 = vpop.permute.xlu0 %127
  %131 = vset.pattern.permute.xlu0 0
  %132 = vperm.xlu0 %131, %v84
  %v133 = vpop.permute.xlu0 %132
  %136 = vset.pattern.permute.xlu0 0
  %137 = vperm.xlu0 %136, %v85
  %v138 = vpop.permute.xlu0 %137
  %141 = vset.pattern.permute.xlu0 0
  %142 = vperm.xlu0 %141, %v86
  %v143 = vpop.permute.xlu0 %142
  %146 = vset.pattern.permute.xlu0 0
  %147 = vperm.xlu0 %146, %v87
  %v148 = vpop.permute.xlu0 %147
  %151 = vset.pattern.permute.xlu0 0
  %152 = vperm.xlu0 %151, %v88
  %v153 = vpop.permute.xlu0 %152
  %156 = vset.pattern.permute.xlu0 0
  %157 = vperm.xlu0 %156, %v89
  %v158 = vpop.permute.xlu0 %157
  %161 = vset.pattern.permute.xlu0 0
  %162 = vperm.xlu0 %161, %v90
  %v163 = vpop.permute.xlu0 %162
  %166 = vset.pattern.permute.xlu0 0
  %167 = vperm.xlu0 %166, %v91
  %v168 = vpop.permute.xlu0 %167
  %171 = vset.pattern.permute.xlu0 0
  %172 = vperm.xlu0 %171, %v92
  %v173 = vpop.permute.xlu0 %172
  %176 = vset.pattern.permute.xlu0 0
  %177 = vperm.xlu0 %176, %v93
  %v178 = vpop.permute.xlu0 %177
  %181 = vset.pattern.permute.xlu0 0
  %182 = vperm.xlu0 %181, %v94
  %v183 = vpop.permute.xlu0 %182
  %v203 = vunpack.c.l.b16 %v59
  %v204 = vunpack.c.l.b16 %v60
  %v205 = vunpack.c.l.b16 %v61
  %v206 = vunpack.c.l.b16 %v62
  %v207 = vunpack.c.l.b16 %v63
  %v208 = vunpack.c.l.b16 %v64
  %v209 = vunpack.c.l.b16 %v65
  %v210 = vunpack.c.l.b16 %v66
  %v211 = vunpack.c.l.b16 %v67
  %v212 = vunpack.c.l.b16 %v68
  %v213 = vunpack.c.l.b16 %v69
  %v214 = vunpack.c.l.b16 %v70
  %v215 = vunpack.c.l.b16 %v71
  %v216 = vunpack.c.l.b16 %v72
  %v217 = vunpack.c.l.b16 %v73
  %v218 = vunpack.c.l.b16 %v74
  %v219 = vunpack.c.l.b16 %v75
  %v220 = vunpack.c.l.b16 %v76
  %v221 = vpack.c.b16 %v204, %v203
  %v222 = vpack.c.b16 %v206, %v205
  %v223 = vpack.c.b16 %v208, %v207
  %v224 = vpack.c.b16 %v210, %v209
  %v225 = vpack.c.b16 %v212, %v211
  %v226 = vpack.c.b16 %v214, %v213
  %v227 = vpack.c.b16 %v216, %v215
  %v228 = vpack.c.b16 %v218, %v217
  %v229 = vpack.c.b16 %v220, %v219
  %vm230 = vcmask 56320
  %v232 = vsel %vm230, %v221, 0
  %v235 = vsel %vm230, %v222, 0
  %v238 = vsel %vm230, %v223, 0
  %v241 = vsel %vm230, %v224, 0
  %v244 = vsel %vm230, %v225, 0
  %v247 = vsel %vm230, %v226, 0
  %v250 = vsel %vm230, %v227, 0
  %v253 = vsel %vm230, %v228, 0
  %v256 = vsel %vm230, %v229, 0
  %v259 = vsel %vm230, %v51, 0
  %v262 = vsel %vm230, %v52, 0
  %v265 = vsel %vm230, %v53, 0
  %v268 = vsel %vm230, %v54, 0
  %v271 = vsel %vm230, %v55, 0
  %v274 = vsel %vm230, %v56, 0
  %v277 = vsel %vm230, %v57, 0
  %v280 = vsel %vm230, %v58, 0
  %282 = vmatpush.bf16.xpose.msra.mxu0 %v280
  %283 = vmatpush.bf16.xpose.msra.mxu0 %v277
  %284 = vmatpush.bf16.xpose.msra.mxu0 %v274
  %285 = vmatpush.bf16.xpose.msra.mxu0 %v271
  %286 = vmatpush.bf16.xpose.msra.mxu0 %v268
  %287 = vmatpush.bf16.xpose.msra.mxu0 %v265
  %288 = vmatpush.bf16.xpose.msra.mxu0 %v262
  %289 = vmatpush.bf16.xpose.msra.mxu0 %v259
  %290 = vmatmul.bf16.gmra.mxu0 %v232
  %v291 = vpop.f32.mrf.mxu0
  %v292 = vadd.f32 %v98, %v291
  %v293 = vpop.f32.mrf.mxu0
  %v294 = vadd.f32 %v103, %v293
  %295 = vmatmul.bf16.gmra.mxu0 %v235
  %v296 = vpop.f32.mrf.mxu0
  %v297 = vadd.f32 %v108, %v296
  %v298 = vpop.f32.mrf.mxu0
  %v299 = vadd.f32 %v113, %v298
  %300 = vmatmul.bf16.gmra.mxu0 %v238
  %v301 = vpop.f32.mrf.mxu0
  %v302 = vadd.f32 %v118, %v301
  %v303 = vpop.f32.mrf.mxu0
  %v304 = vadd.f32 %v123, %v303
  %305 = vmatmul.bf16.gmra.mxu0 %v241
  %v306 = vpop.f32.mrf.mxu0
  %v307 = vadd.f32 %v128, %v306
  %v308 = vpop.f32.mrf.mxu0
  %v309 = vadd.f32 %v133, %v308
  %310 = vmatmul.bf16.gmra.mxu0 %v244
  %v311 = vpop.f32.mrf.mxu0
  %v312 = vadd.f32 %v138, %v311
  %v313 = vpop.f32.mrf.mxu0
  %v314 = vadd.f32 %v143, %v313
  %315 = vmatmul.bf16.gmra.mxu0 %v247
  %v316 = vpop.f32.mrf.mxu0
  %v317 = vadd.f32 %v148, %v316
  %v318 = vpop.f32.mrf.mxu0
  %v319 = vadd.f32 %v153, %v318
  %320 = vmatmul.bf16.gmra.mxu0 %v250
  %v321 = vpop.f32.mrf.mxu0
  %v322 = vadd.f32 %v158, %v321
  %v323 = vpop.f32.mrf.mxu0
  %v324 = vadd.f32 %v163, %v323
  %325 = vmatmul.bf16.gmra.mxu0 %v253
  %v326 = vpop.f32.mrf.mxu0
  %v327 = vadd.f32 %v168, %v326
  %v328 = vpop.f32.mrf.mxu0
  %v329 = vadd.f32 %v173, %v328
  %330 = vmatmul.bf16.gmra.mxu0 %v256
  %v331 = vpop.f32.mrf.mxu0
  %v332 = vadd.f32 %v178, %v331
  %v333 = vpop.f32.mrf.mxu0
  %v334 = vadd.f32 %v183, %v333
  %335 = vdwg.mxu0
  %v336 = vmul.f32 %v292, 0.5
  %v337 = vmul.f32 %v294, 0.5
  %v338 = vmul.f32 %v297, 0.5
  %v339 = vmul.f32 %v299, 0.5
  %v340 = vmul.f32 %v302, 0.5
  %v341 = vmul.f32 %v304, 0.5
  %v342 = vmul.f32 %v307, 0.5
  %v343 = vmul.f32 %v309, 0.5
  %v344 = vmul.f32 %v312, 0.5
  %v345 = vmul.f32 %v314, 0.5
  %v346 = vmul.f32 %v317, 0.5
  %v347 = vmul.f32 %v319, 0.5
  %v348 = vmul.f32 %v322, 0.5
  %v349 = vmul.f32 %v324, 0.5
  %v350 = vmul.f32 %v327, 0.5
  %v351 = vmul.f32 %v329, 0.5
  %v352 = vmul.f32 %v332, 0.5
  %v353 = vmul.f32 %v334, 0.5
  %v354 = vtanh.pop %v336
  %v355 = vtanh.pop %v337
  %v356 = vtanh.pop %v338
  %v357 = vtanh.pop %v339
  %v358 = vtanh.pop %v340
  %v359 = vtanh.pop %v341
  %v360 = vtanh.pop %v342
  %v361 = vtanh.pop %v343
  %v362 = vtanh.pop %v344
  %v363 = vtanh.pop %v345
  %v364 = vtanh.pop %v346
  %v365 = vtanh.pop %v347
  %v366 = vtanh.pop %v348
  %v367 = vtanh.pop %v349
  %v368 = vtanh.pop %v350
  %v369 = vtanh.pop %v351
  %v370 = vtanh.pop %v352
  %v371 = vtanh.pop %v353
  %v372 = vadd.f32 %v354, 1.0
  %v373 = vadd.f32 %v355, 1.0
  %v374 = vadd.f32 %v356, 1.0
  %v375 = vadd.f32 %v357, 1.0
  %v376 = vadd.f32 %v358, 1.0
  %v377 = vadd.f32 %v359, 1.0
  %v378 = vadd.f32 %v360, 1.0
  %v379 = vadd.f32 %v361, 1.0
  %v380 = vadd.f32 %v362, 1.0
  %v381 = vadd.f32 %v363, 1.0
  %v382 = vadd.f32 %v364, 1.0
  %v383 = vadd.f32 %v365, 1.0
  %v384 = vadd.f32 %v366, 1.0
  %v385 = vadd.f32 %v367, 1.0
  %v386 = vadd.f32 %v368, 1.0
  %v387 = vadd.f32 %v369, 1.0
  %v388 = vadd.f32 %v370, 1.0
  %v389 = vadd.f32 %v371, 1.0
  %v390 = vmul.f32 %v372, 0.5
  %v391 = vmul.f32 %v373, 0.5
  %v392 = vmul.f32 %v374, 0.5
  %v393 = vmul.f32 %v375, 0.5
  %v394 = vmul.f32 %v376, 0.5
  %v395 = vmul.f32 %v377, 0.5
  %v396 = vmul.f32 %v378, 0.5
  %v397 = vmul.f32 %v379, 0.5
  %v398 = vmul.f32 %v380, 0.5
  %v399 = vmul.f32 %v381, 0.5
  %v400 = vmul.f32 %v382, 0.5
  %v401 = vmul.f32 %v383, 0.5
  %v402 = vmul.f32 %v384, 0.5
  %v403 = vmul.f32 %v385, 0.5
  %v404 = vmul.f32 %v386, 0.5
  %v405 = vmul.f32 %v387, 0.5
  %v406 = vmul.f32 %v388, 0.5
  %v407 = vmul.f32 %v389, 0.5
  %v408 = vld [vmem:[%s3] sm:$0xff]
  %v409 = vld [vmem:[%s3 + $0x8] sm:$0xff]
  %v410 = vld [vmem:[%s3 + $0x10] sm:$0xff]
  %v411 = vld [vmem:[%s3 + $0x18] sm:$0xff]
  %v412 = vld [vmem:[%s3 + $0x20] sm:$0xff]
  %v413 = vld [vmem:[%s3 + $0x28] sm:$0xff]
  %v414 = vld [vmem:[%s3 + $0x30] sm:$0xff]
  %v415 = vld [vmem:[%s3 + $0x38] sm:$0xff]
  %v416 = vld [vmem:[%s3 + $0x40] sm:$0xff]
  %v417 = vld [vmem:[%s3 + $0x48] sm:$0xff]
  %v418 = vld [vmem:[%s3 + $0x50] sm:$0xff]
  %v419 = vld [vmem:[%s3 + $0x58] sm:$0xff]
  %v420 = vld [vmem:[%s3 + $0x60] sm:$0xff]
  %v421 = vld [vmem:[%s3 + $0x68] sm:$0xff]
  %v422 = vld [vmem:[%s3 + $0x70] sm:$0xff]
  %v423 = vld [vmem:[%s3 + $0x78] sm:$0xff]
  %v424 = vld [vmem:[%s3 + $0x80] sm:$0xff]
  %v425 = vld [vmem:[%s3 + $0x88] sm:$0x33]
  %v426 = vpack.c.bf16 %v391, %v390
  %v427 = vpack.c.bf16 %v393, %v392
  %v428 = vpack.c.bf16 %v395, %v394
  %v429 = vpack.c.bf16 %v397, %v396
  %v430 = vpack.c.bf16 %v399, %v398
  %v431 = vpack.c.bf16 %v401, %v400
  %v432 = vpack.c.bf16 %v403, %v402
  %v433 = vpack.c.bf16 %v405, %v404
  %v434 = vpack.c.bf16 %v407, %v406
  %v435 = vld [vmem:[%s4] sm:$0xff]
  %v436 = vld [vmem:[%s4 + $0x8] sm:$0xff]
  %v437 = vld [vmem:[%s4 + $0x10] sm:$0xff]
  %v438 = vld [vmem:[%s4 + $0x18] sm:$0xff]
  %v439 = vld [vmem:[%s4 + $0x20] sm:$0xff]
  %v440 = vld [vmem:[%s4 + $0x28] sm:$0xff]
  %v441 = vld [vmem:[%s4 + $0x30] sm:$0xff]
  %v442 = vld [vmem:[%s4 + $0x38] sm:$0xff]
  %v443 = vld [vmem:[%s4 + $0x40] sm:$0xff]
  %v444 = vld [vmem:[%s4 + $0x48] sm:$0xff]
  %v445 = vld [vmem:[%s4 + $0x50] sm:$0xff]
  %v446 = vld [vmem:[%s4 + $0x58] sm:$0xff]
  %v447 = vld [vmem:[%s4 + $0x60] sm:$0xff]
  %v448 = vld [vmem:[%s4 + $0x68] sm:$0xff]
  %v449 = vld [vmem:[%s4 + $0x70] sm:$0xff]
  %v450 = vld [vmem:[%s4 + $0x78] sm:$0xff]
  %v451 = vld [vmem:[%s4 + $0x80] sm:$0xff]
  %v452 = vld [vmem:[%s4 + $0x88] sm:$0xf]
  %454 = vset.pattern.permute.xlu0 0
  %455 = vperm.xlu0 %454, %v435
  %v456 = vpop.permute.xlu0 %455
  %459 = vset.pattern.permute.xlu0 0
  %460 = vperm.xlu0 %459, %v436
  %v461 = vpop.permute.xlu0 %460
  %464 = vset.pattern.permute.xlu0 0
  %465 = vperm.xlu0 %464, %v437
  %v466 = vpop.permute.xlu0 %465
  %469 = vset.pattern.permute.xlu0 0
  %470 = vperm.xlu0 %469, %v438
  %v471 = vpop.permute.xlu0 %470
  %474 = vset.pattern.permute.xlu0 0
  %475 = vperm.xlu0 %474, %v439
  %v476 = vpop.permute.xlu0 %475
  %479 = vset.pattern.permute.xlu0 0
  %480 = vperm.xlu0 %479, %v440
  %v481 = vpop.permute.xlu0 %480
  %484 = vset.pattern.permute.xlu0 0
  %485 = vperm.xlu0 %484, %v441
  %v486 = vpop.permute.xlu0 %485
  %489 = vset.pattern.permute.xlu0 0
  %490 = vperm.xlu0 %489, %v442
  %v491 = vpop.permute.xlu0 %490
  %494 = vset.pattern.permute.xlu0 0
  %495 = vperm.xlu0 %494, %v443
  %v496 = vpop.permute.xlu0 %495
  %499 = vset.pattern.permute.xlu0 0
  %500 = vperm.xlu0 %499, %v444
  %v501 = vpop.permute.xlu0 %500
  %504 = vset.pattern.permute.xlu0 0
  %505 = vperm.xlu0 %504, %v445
  %v506 = vpop.permute.xlu0 %505
  %509 = vset.pattern.permute.xlu0 0
  %510 = vperm.xlu0 %509, %v446
  %v511 = vpop.permute.xlu0 %510
  %514 = vset.pattern.permute.xlu0 0
  %515 = vperm.xlu0 %514, %v447
  %v516 = vpop.permute.xlu0 %515
  %519 = vset.pattern.permute.xlu0 0
  %520 = vperm.xlu0 %519, %v448
  %v521 = vpop.permute.xlu0 %520
  %524 = vset.pattern.permute.xlu0 0
  %525 = vperm.xlu0 %524, %v449
  %v526 = vpop.permute.xlu0 %525
  %529 = vset.pattern.permute.xlu0 0
  %530 = vperm.xlu0 %529, %v450
  %v531 = vpop.permute.xlu0 %530
  %534 = vset.pattern.permute.xlu0 0
  %535 = vperm.xlu0 %534, %v451
  %v536 = vpop.permute.xlu0 %535
  %539 = vset.pattern.permute.xlu0 0
  %540 = vperm.xlu0 %539, %v452
  %v541 = vpop.permute.xlu0 %540
  %v561 = vunpack.c.l.b16 %v408
  %v562 = vunpack.c.h.b16 %v408
  %v563 = vunpack.c.l.b16 %v409
  %v564 = vunpack.c.h.b16 %v409
  %v565 = vunpack.c.l.b16 %v410
  %v566 = vunpack.c.h.b16 %v410
  %v567 = vunpack.c.l.b16 %v411
  %v568 = vunpack.c.h.b16 %v411
  %v569 = vunpack.c.l.b16 %v412
  %v570 = vunpack.c.h.b16 %v412
  %v571 = vunpack.c.l.b16 %v413
  %v572 = vunpack.c.h.b16 %v413
  %v573 = vunpack.c.l.b16 %v414
  %v574 = vunpack.c.h.b16 %v414
  %v575 = vunpack.c.l.b16 %v415
  %v576 = vunpack.c.h.b16 %v415
  %v577 = vunpack.c.l.b16 %v416
  %v578 = vunpack.c.h.b16 %v416
  %v579 = vunpack.c.l.b16 %v417
  %v580 = vunpack.c.h.b16 %v417
  %v581 = vunpack.c.l.b16 %v418
  %v582 = vunpack.c.h.b16 %v418
  %v583 = vunpack.c.l.b16 %v419
  %v584 = vunpack.c.h.b16 %v419
  %v585 = vunpack.c.l.b16 %v420
  %v586 = vunpack.c.h.b16 %v420
  %v587 = vunpack.c.l.b16 %v421
  %v588 = vunpack.c.h.b16 %v421
  %v589 = vunpack.c.l.b16 %v422
  %v590 = vunpack.c.h.b16 %v422
  %v591 = vunpack.c.l.b16 %v423
  %v592 = vunpack.c.h.b16 %v423
  %v593 = vunpack.c.l.b16 %v424
  %v594 = vunpack.c.h.b16 %v424
  %v595 = vunpack.c.l.b16 %v425
  %v596 = vunpack.c.h.b16 %v425
  %v597 = vpack.c.b16 %v563, %v561
  %v598 = vpack.c.b16 %v564, %v562
  %v599 = vpack.c.b16 %v567, %v565
  %v600 = vpack.c.b16 %v568, %v566
  %v601 = vpack.c.b16 %v571, %v569
  %v602 = vpack.c.b16 %v572, %v570
  %v603 = vpack.c.b16 %v575, %v573
  %v604 = vpack.c.b16 %v576, %v574
  %v605 = vpack.c.b16 %v579, %v577
  %v606 = vpack.c.b16 %v580, %v578
  %v607 = vpack.c.b16 %v583, %v581
  %v608 = vpack.c.b16 %v584, %v582
  %v609 = vpack.c.b16 %v587, %v585
  %v610 = vpack.c.b16 %v588, %v586
  %v611 = vpack.c.b16 %v591, %v589
  %v612 = vpack.c.b16 %v592, %v590
  %v613 = vpack.c.b16 %v595, %v593
  %v614 = vpack.c.b16 %v596, %v594
  %vm624 = vcmask 97280
  %v626 = vsel %vm624, %v598, 0
  %v629 = vsel %vm624, %v600, 0
  %v632 = vsel %vm624, %v602, 0
  %v635 = vsel %vm624, %v604, 0
  %v638 = vsel %vm624, %v606, 0
  %v641 = vsel %vm624, %v608, 0
  %v644 = vsel %vm624, %v610, 0
  %v647 = vsel %vm624, %v612, 0
  %v650 = vsel %vm624, %v614, 0
  %vm652 = vcmask 1045504
  %v654 = vsel %vm652, %v434, 0
  %656 = vmatpush.bf16.msra.mxu0 %v433
  %657 = vmatpush.bf16.msra.mxu0 %v432
  %658 = vmatpush.bf16.msra.mxu0 %v431
  %659 = vmatpush.bf16.msra.mxu0 %v430
  %660 = vmatpush.bf16.msra.mxu0 %v429
  %661 = vmatpush.bf16.msra.mxu0 %v428
  %662 = vmatpush.bf16.msra.mxu0 %v427
  %663 = vmatpush.bf16.msra.mxu0 %v426
  %664 = vmatmul.bf16.gmra.mxu0 %v597
  %v665 = vpop.f32.mrf.mxu0
  %v666 = vadd.f32 %v456, %v665
  %v667 = vpop.f32.mrf.mxu0
  %v668 = vadd.f32 %v461, %v667
  %669 = vmatmul.bf16.gmra.mxu0 %v599
  %v670 = vpop.f32.mrf.mxu0
  %v671 = vadd.f32 %v466, %v670
  %v672 = vpop.f32.mrf.mxu0
  %v673 = vadd.f32 %v471, %v672
  %674 = vmatmul.bf16.gmra.mxu0 %v601
  %v675 = vpop.f32.mrf.mxu0
  %v676 = vadd.f32 %v476, %v675
  %v677 = vpop.f32.mrf.mxu0
  %v678 = vadd.f32 %v481, %v677
  %679 = vmatmul.bf16.gmra.mxu0 %v603
  %v680 = vpop.f32.mrf.mxu0
  %v681 = vadd.f32 %v486, %v680
  %v682 = vpop.f32.mrf.mxu0
  %v683 = vadd.f32 %v491, %v682
  %684 = vmatmul.bf16.gmra.mxu0 %v605
  %v685 = vpop.f32.mrf.mxu0
  %v686 = vadd.f32 %v496, %v685
  %v687 = vpop.f32.mrf.mxu0
  %v688 = vadd.f32 %v501, %v687
  %689 = vmatmul.bf16.gmra.mxu0 %v607
  %v690 = vpop.f32.mrf.mxu0
  %v691 = vadd.f32 %v506, %v690
  %v692 = vpop.f32.mrf.mxu0
  %v693 = vadd.f32 %v511, %v692
  %694 = vmatmul.bf16.gmra.mxu0 %v609
  %v695 = vpop.f32.mrf.mxu0
  %v696 = vadd.f32 %v516, %v695
  %v697 = vpop.f32.mrf.mxu0
  %v698 = vadd.f32 %v521, %v697
  %699 = vmatmul.bf16.gmra.mxu0 %v611
  %v700 = vpop.f32.mrf.mxu0
  %v701 = vadd.f32 %v526, %v700
  %v702 = vpop.f32.mrf.mxu0
  %v703 = vadd.f32 %v531, %v702
  %704 = vmatmul.bf16.gmra.mxu0 %v613
  %v705 = vpop.f32.mrf.mxu0
  %v706 = vadd.f32 %v536, %v705
  %v707 = vpop.f32.mrf.mxu0
  %v708 = vadd.f32 %v541, %v707
  %709 = vdwg.mxu0
  %710 = vmatpush.bf16.msra.mxu0 0
  %711 = vmatpush.bf16.msra.mxu0 0
  %712 = vmatpush.bf16.msra.mxu0 0
  %713 = vmatpush.bf16.msra.mxu0 0
  %714 = vmatpush.bf16.msra.mxu0 0
  %715 = vmatpush.bf16.msra.mxu0 0
  %716 = vmatpush.bf16.msra.mxu0 0
  %717 = vmatpush.bf16.msra.mxu0 %v654
  %718 = vmatmul.bf16.gmra.mxu0 %v626
  %v719 = vpop.f32.mrf.mxu0
  %v720 = vadd.f32 %v666, %v719
  %v721 = vpop.f32.mrf.mxu0
  %v722 = vadd.f32 %v668, %v721
  %723 = vmatmul.bf16.gmra.mxu0 %v629
  %v724 = vpop.f32.mrf.mxu0
  %v725 = vadd.f32 %v671, %v724
  %v726 = vpop.f32.mrf.mxu0
  %v727 = vadd.f32 %v673, %v726
  %728 = vmatmul.bf16.gmra.mxu0 %v632
  %v729 = vpop.f32.mrf.mxu0
  %v730 = vadd.f32 %v676, %v729
  %v731 = vpop.f32.mrf.mxu0
  %v732 = vadd.f32 %v678, %v731
  %733 = vmatmul.bf16.gmra.mxu0 %v635
  %v734 = vpop.f32.mrf.mxu0
  %v735 = vadd.f32 %v681, %v734
  %v736 = vpop.f32.mrf.mxu0
  %v737 = vadd.f32 %v683, %v736
  %738 = vmatmul.bf16.gmra.mxu0 %v638
  %v739 = vpop.f32.mrf.mxu0
  %v740 = vadd.f32 %v686, %v739
  %v741 = vpop.f32.mrf.mxu0
  %v742 = vadd.f32 %v688, %v741
  %743 = vmatmul.bf16.gmra.mxu0 %v641
  %v744 = vpop.f32.mrf.mxu0
  %v745 = vadd.f32 %v691, %v744
  %v746 = vpop.f32.mrf.mxu0
  %v747 = vadd.f32 %v693, %v746
  %748 = vmatmul.bf16.gmra.mxu0 %v644
  %v749 = vpop.f32.mrf.mxu0
  %v750 = vadd.f32 %v696, %v749
  %v751 = vpop.f32.mrf.mxu0
  %v752 = vadd.f32 %v698, %v751
  %753 = vmatmul.bf16.gmra.mxu0 %v647
  %v754 = vpop.f32.mrf.mxu0
  %v755 = vadd.f32 %v701, %v754
  %v756 = vpop.f32.mrf.mxu0
  %v757 = vadd.f32 %v703, %v756
  %758 = vmatmul.bf16.gmra.mxu0 %v650
  %v759 = vpop.f32.mrf.mxu0
  %v760 = vadd.f32 %v706, %v759
  %v761 = vpop.f32.mrf.mxu0
  %v762 = vadd.f32 %v708, %v761
  %763 = vdwg.mxu0
  %v764 = vmul.f32 %v720, 0.5
  %v765 = vmul.f32 %v722, 0.5
  %v766 = vmul.f32 %v725, 0.5
  %v767 = vmul.f32 %v727, 0.5
  %v768 = vmul.f32 %v730, 0.5
  %v769 = vmul.f32 %v732, 0.5
  %v770 = vmul.f32 %v735, 0.5
  %v771 = vmul.f32 %v737, 0.5
  %v772 = vmul.f32 %v740, 0.5
  %v773 = vmul.f32 %v742, 0.5
  %v774 = vmul.f32 %v745, 0.5
  %v775 = vmul.f32 %v747, 0.5
  %v776 = vmul.f32 %v750, 0.5
  %v777 = vmul.f32 %v752, 0.5
  %v778 = vmul.f32 %v755, 0.5
  %v779 = vmul.f32 %v757, 0.5
  %v780 = vmul.f32 %v760, 0.5
  %v781 = vmul.f32 %v762, 0.5
  %v782 = vtanh.pop %v764
  %v783 = vtanh.pop %v765
  %v784 = vtanh.pop %v766
  %v785 = vtanh.pop %v767
  %v786 = vtanh.pop %v768
  %v787 = vtanh.pop %v769
  %v788 = vtanh.pop %v770
  %v789 = vtanh.pop %v771
  %v790 = vtanh.pop %v772
  %v791 = vtanh.pop %v773
  %v792 = vtanh.pop %v774
  %v793 = vtanh.pop %v775
  %v794 = vtanh.pop %v776
  %v795 = vtanh.pop %v777
  %v796 = vtanh.pop %v778
  %v797 = vtanh.pop %v779
  %v798 = vtanh.pop %v780
  %v799 = vtanh.pop %v781
  %v800 = vadd.f32 %v782, 1.0
  %v801 = vadd.f32 %v783, 1.0
  %v802 = vadd.f32 %v784, 1.0
  %v803 = vadd.f32 %v785, 1.0
  %v804 = vadd.f32 %v786, 1.0
  %v805 = vadd.f32 %v787, 1.0
  %v806 = vadd.f32 %v788, 1.0
  %v807 = vadd.f32 %v789, 1.0
  %v808 = vadd.f32 %v790, 1.0
  %v809 = vadd.f32 %v791, 1.0
  %v810 = vadd.f32 %v792, 1.0
  %v811 = vadd.f32 %v793, 1.0
  %v812 = vadd.f32 %v794, 1.0
  %v813 = vadd.f32 %v795, 1.0
  %v814 = vadd.f32 %v796, 1.0
  %v815 = vadd.f32 %v797, 1.0
  %v816 = vadd.f32 %v798, 1.0
  %v817 = vadd.f32 %v799, 1.0
  %v818 = vmul.f32 %v800, 0.5
  %v819 = vmul.f32 %v801, 0.5
  %v820 = vmul.f32 %v802, 0.5
  %v821 = vmul.f32 %v803, 0.5
  %v822 = vmul.f32 %v804, 0.5
  %v823 = vmul.f32 %v805, 0.5
  %v824 = vmul.f32 %v806, 0.5
  %v825 = vmul.f32 %v807, 0.5
  %v826 = vmul.f32 %v808, 0.5
  %v827 = vmul.f32 %v809, 0.5
  %v828 = vmul.f32 %v810, 0.5
  %v829 = vmul.f32 %v811, 0.5
  %v830 = vmul.f32 %v812, 0.5
  %v831 = vmul.f32 %v813, 0.5
  %v832 = vmul.f32 %v814, 0.5
  %v833 = vmul.f32 %v815, 0.5
  %v834 = vmul.f32 %v816, 0.5
  %v835 = vmul.f32 %v817, 0.5
  %v836 = vld [vmem:[%s5] sm:$0xff]
  %v837 = vld [vmem:[%s5 + $0x8] sm:$0xff]
  %v838 = vld [vmem:[%s5 + $0x10] sm:$0xff]
  %v839 = vld [vmem:[%s5 + $0x18] sm:$0xff]
  %v840 = vld [vmem:[%s5 + $0x20] sm:$0xff]
  %v841 = vld [vmem:[%s5 + $0x28] sm:$0xff]
  %v842 = vld [vmem:[%s5 + $0x30] sm:$0xff]
  %v843 = vld [vmem:[%s5 + $0x38] sm:$0xff]
  %v844 = vld [vmem:[%s5 + $0x40] sm:$0xff]
  %v845 = vld [vmem:[%s5 + $0x48] sm:$0xff]
  %v846 = vld [vmem:[%s5 + $0x50] sm:$0xff]
  %v847 = vld [vmem:[%s5 + $0x58] sm:$0xff]
  %v848 = vld [vmem:[%s5 + $0x60] sm:$0xff]
  %v849 = vld [vmem:[%s5 + $0x68] sm:$0xff]
  %v850 = vld [vmem:[%s5 + $0x70] sm:$0xff]
  %v851 = vld [vmem:[%s5 + $0x78] sm:$0xff]
  %v852 = vld [vmem:[%s5 + $0x80] sm:$0xff]
  %v853 = vld [vmem:[%s5 + $0x88] sm:$0x33]
  %v854 = vpack.c.bf16 %v819, %v818
  %v855 = vpack.c.bf16 %v821, %v820
  %v856 = vpack.c.bf16 %v823, %v822
  %v857 = vpack.c.bf16 %v825, %v824
  %v858 = vpack.c.bf16 %v827, %v826
  %v859 = vpack.c.bf16 %v829, %v828
  %v860 = vpack.c.bf16 %v831, %v830
  %v861 = vpack.c.bf16 %v833, %v832
  %v862 = vpack.c.bf16 %v835, %v834
  %v863 = vld [vmem:[%s6] sm:$0xff]
  %v864 = vld [vmem:[%s6 + $0x8] sm:$0xff]
  %v865 = vld [vmem:[%s6 + $0x10] sm:$0xff]
  %v866 = vld [vmem:[%s6 + $0x18] sm:$0xff]
  %v867 = vld [vmem:[%s6 + $0x20] sm:$0xff]
  %v868 = vld [vmem:[%s6 + $0x28] sm:$0xff]
  %v869 = vld [vmem:[%s6 + $0x30] sm:$0xff]
  %v870 = vld [vmem:[%s6 + $0x38] sm:$0xff]
  %v871 = vld [vmem:[%s6 + $0x40] sm:$0xff]
  %v872 = vld [vmem:[%s6 + $0x48] sm:$0xff]
  %v873 = vld [vmem:[%s6 + $0x50] sm:$0xff]
  %v874 = vld [vmem:[%s6 + $0x58] sm:$0xff]
  %v875 = vld [vmem:[%s6 + $0x60] sm:$0xff]
  %v876 = vld [vmem:[%s6 + $0x68] sm:$0xff]
  %v877 = vld [vmem:[%s6 + $0x70] sm:$0xff]
  %v878 = vld [vmem:[%s6 + $0x78] sm:$0xff]
  %v879 = vld [vmem:[%s6 + $0x80] sm:$0xff]
  %v880 = vld [vmem:[%s6 + $0x88] sm:$0xf]
  %882 = vset.pattern.permute.xlu0 0
  %883 = vperm.xlu0 %882, %v863
  %v884 = vpop.permute.xlu0 %883
  %887 = vset.pattern.permute.xlu0 0
  %888 = vperm.xlu0 %887, %v864
  %v889 = vpop.permute.xlu0 %888
  %892 = vset.pattern.permute.xlu0 0
  %893 = vperm.xlu0 %892, %v865
  %v894 = vpop.permute.xlu0 %893
  %897 = vset.pattern.permute.xlu0 0
  %898 = vperm.xlu0 %897, %v866
  %v899 = vpop.permute.xlu0 %898
  %902 = vset.pattern.permute.xlu0 0
  %903 = vperm.xlu0 %902, %v867
  %v904 = vpop.permute.xlu0 %903
  %907 = vset.pattern.permute.xlu0 0
  %908 = vperm.xlu0 %907, %v868
  %v909 = vpop.permute.xlu0 %908
  %912 = vset.pattern.permute.xlu0 0
  %913 = vperm.xlu0 %912, %v869
  %v914 = vpop.permute.xlu0 %913
  %917 = vset.pattern.permute.xlu0 0
  %918 = vperm.xlu0 %917, %v870
  %v919 = vpop.permute.xlu0 %918
  %922 = vset.pattern.permute.xlu0 0
  %923 = vperm.xlu0 %922, %v871
  %v924 = vpop.permute.xlu0 %923
  %927 = vset.pattern.permute.xlu0 0
  %928 = vperm.xlu0 %927, %v872
  %v929 = vpop.permute.xlu0 %928
  %932 = vset.pattern.permute.xlu0 0
  %933 = vperm.xlu0 %932, %v873
  %v934 = vpop.permute.xlu0 %933
  %937 = vset.pattern.permute.xlu0 0
  %938 = vperm.xlu0 %937, %v874
  %v939 = vpop.permute.xlu0 %938
  %942 = vset.pattern.permute.xlu0 0
  %943 = vperm.xlu0 %942, %v875
  %v944 = vpop.permute.xlu0 %943
  %947 = vset.pattern.permute.xlu0 0
  %948 = vperm.xlu0 %947, %v876
  %v949 = vpop.permute.xlu0 %948
  %952 = vset.pattern.permute.xlu0 0
  %953 = vperm.xlu0 %952, %v877
  %v954 = vpop.permute.xlu0 %953
  %957 = vset.pattern.permute.xlu0 0
  %958 = vperm.xlu0 %957, %v878
  %v959 = vpop.permute.xlu0 %958
  %962 = vset.pattern.permute.xlu0 0
  %963 = vperm.xlu0 %962, %v879
  %v964 = vpop.permute.xlu0 %963
  %967 = vset.pattern.permute.xlu0 0
  %968 = vperm.xlu0 %967, %v880
  %v969 = vpop.permute.xlu0 %968
  %v989 = vunpack.c.l.b16 %v836
  %v990 = vunpack.c.h.b16 %v836
  %v991 = vunpack.c.l.b16 %v837
  %v992 = vunpack.c.h.b16 %v837
  %v993 = vunpack.c.l.b16 %v838
  %v994 = vunpack.c.h.b16 %v838
  %v995 = vunpack.c.l.b16 %v839
  %v996 = vunpack.c.h.b16 %v839
  %v997 = vunpack.c.l.b16 %v840
  %v998 = vunpack.c.h.b16 %v840
  %v999 = vunpack.c.l.b16 %v841
  %v1000 = vunpack.c.h.b16 %v841
  %v1001 = vunpack.c.l.b16 %v842
  %v1002 = vunpack.c.h.b16 %v842
  %v1003 = vunpack.c.l.b16 %v843
  %v1004 = vunpack.c.h.b16 %v843
  %v1005 = vunpack.c.l.b16 %v844
  %v1006 = vunpack.c.h.b16 %v844
  %v1007 = vunpack.c.l.b16 %v845
  %v1008 = vunpack.c.h.b16 %v845
  %v1009 = vunpack.c.l.b16 %v846
  %v1010 = vunpack.c.h.b16 %v846
  %v1011 = vunpack.c.l.b16 %v847
  %v1012 = vunpack.c.h.b16 %v847
  %v1013 = vunpack.c.l.b16 %v848
  %v1014 = vunpack.c.h.b16 %v848
  %v1015 = vunpack.c.l.b16 %v849
  %v1016 = vunpack.c.h.b16 %v849
  %v1017 = vunpack.c.l.b16 %v850
  %v1018 = vunpack.c.h.b16 %v850
  %v1019 = vunpack.c.l.b16 %v851
  %v1020 = vunpack.c.h.b16 %v851
  %v1021 = vunpack.c.l.b16 %v852
  %v1022 = vunpack.c.h.b16 %v852
  %v1023 = vunpack.c.l.b16 %v853
  %v1024 = vunpack.c.h.b16 %v853
  %v1025 = vpack.c.b16 %v991, %v989
  %v1026 = vpack.c.b16 %v992, %v990
  %v1027 = vpack.c.b16 %v995, %v993
  %v1028 = vpack.c.b16 %v996, %v994
  %v1029 = vpack.c.b16 %v999, %v997
  %v1030 = vpack.c.b16 %v1000, %v998
  %v1031 = vpack.c.b16 %v1003, %v1001
  %v1032 = vpack.c.b16 %v1004, %v1002
  %v1033 = vpack.c.b16 %v1007, %v1005
  %v1034 = vpack.c.b16 %v1008, %v1006
  %v1035 = vpack.c.b16 %v1011, %v1009
  %v1036 = vpack.c.b16 %v1012, %v1010
  %v1037 = vpack.c.b16 %v1015, %v1013
  %v1038 = vpack.c.b16 %v1016, %v1014
  %v1039 = vpack.c.b16 %v1019, %v1017
  %v1040 = vpack.c.b16 %v1020, %v1018
  %v1041 = vpack.c.b16 %v1023, %v1021
  %v1042 = vpack.c.b16 %v1024, %v1022
  %v1053 = vsel %vm624, %v1026, 0
  %v1056 = vsel %vm624, %v1028, 0
  %v1059 = vsel %vm624, %v1030, 0
  %v1062 = vsel %vm624, %v1032, 0
  %v1065 = vsel %vm624, %v1034, 0
  %v1068 = vsel %vm624, %v1036, 0
  %v1071 = vsel %vm624, %v1038, 0
  %v1074 = vsel %vm624, %v1040, 0
  %v1077 = vsel %vm624, %v1042, 0
  %v1080 = vsel %vm652, %v862, 0
  %1082 = vmatpush.bf16.msra.mxu0 %v861
  %1083 = vmatpush.bf16.msra.mxu0 %v860
  %1084 = vmatpush.bf16.msra.mxu0 %v859
  %1085 = vmatpush.bf16.msra.mxu0 %v858
  %1086 = vmatpush.bf16.msra.mxu0 %v857
  %1087 = vmatpush.bf16.msra.mxu0 %v856
  %1088 = vmatpush.bf16.msra.mxu0 %v855
  %1089 = vmatpush.bf16.msra.mxu0 %v854
  %1090 = vmatmul.bf16.gmra.mxu0 %v1025
  %v1091 = vpop.f32.mrf.mxu0
  %v1092 = vadd.f32 %v884, %v1091
  %v1093 = vpop.f32.mrf.mxu0
  %v1094 = vadd.f32 %v889, %v1093
  %1095 = vmatmul.bf16.gmra.mxu0 %v1027
  %v1096 = vpop.f32.mrf.mxu0
  %v1097 = vadd.f32 %v894, %v1096
  %v1098 = vpop.f32.mrf.mxu0
  %v1099 = vadd.f32 %v899, %v1098
  %1100 = vmatmul.bf16.gmra.mxu0 %v1029
  %v1101 = vpop.f32.mrf.mxu0
  %v1102 = vadd.f32 %v904, %v1101
  %v1103 = vpop.f32.mrf.mxu0
  %v1104 = vadd.f32 %v909, %v1103
  %1105 = vmatmul.bf16.gmra.mxu0 %v1031
  %v1106 = vpop.f32.mrf.mxu0
  %v1107 = vadd.f32 %v914, %v1106
  %v1108 = vpop.f32.mrf.mxu0
  %v1109 = vadd.f32 %v919, %v1108
  %1110 = vmatmul.bf16.gmra.mxu0 %v1033
  %v1111 = vpop.f32.mrf.mxu0
  %v1112 = vadd.f32 %v924, %v1111
  %v1113 = vpop.f32.mrf.mxu0
  %v1114 = vadd.f32 %v929, %v1113
  %1115 = vmatmul.bf16.gmra.mxu0 %v1035
  %v1116 = vpop.f32.mrf.mxu0
  %v1117 = vadd.f32 %v934, %v1116
  %v1118 = vpop.f32.mrf.mxu0
  %v1119 = vadd.f32 %v939, %v1118
  %1120 = vmatmul.bf16.gmra.mxu0 %v1037
  %v1121 = vpop.f32.mrf.mxu0
  %v1122 = vadd.f32 %v944, %v1121
  %v1123 = vpop.f32.mrf.mxu0
  %v1124 = vadd.f32 %v949, %v1123
  %1125 = vmatmul.bf16.gmra.mxu0 %v1039
  %v1126 = vpop.f32.mrf.mxu0
  %v1127 = vadd.f32 %v954, %v1126
  %v1128 = vpop.f32.mrf.mxu0
  %v1129 = vadd.f32 %v959, %v1128
  %1130 = vmatmul.bf16.gmra.mxu0 %v1041
  %v1131 = vpop.f32.mrf.mxu0
  %v1132 = vadd.f32 %v964, %v1131
  %v1133 = vpop.f32.mrf.mxu0
  %v1134 = vadd.f32 %v969, %v1133
  %1135 = vdwg.mxu0
  %1136 = vmatpush.bf16.msra.mxu0 0
  %1137 = vmatpush.bf16.msra.mxu0 0
  %1138 = vmatpush.bf16.msra.mxu0 0
  %1139 = vmatpush.bf16.msra.mxu0 0
  %1140 = vmatpush.bf16.msra.mxu0 0
  %1141 = vmatpush.bf16.msra.mxu0 0
  %1142 = vmatpush.bf16.msra.mxu0 0
  %1143 = vmatpush.bf16.msra.mxu0 %v1080
  %1144 = vmatmul.bf16.gmra.mxu0 %v1053
  %v1145 = vpop.f32.mrf.mxu0
  %v1146 = vadd.f32 %v1092, %v1145
  %v1147 = vpop.f32.mrf.mxu0
  %v1148 = vadd.f32 %v1094, %v1147
  %1149 = vmatmul.bf16.gmra.mxu0 %v1056
  %v1150 = vpop.f32.mrf.mxu0
  %v1151 = vadd.f32 %v1097, %v1150
  %v1152 = vpop.f32.mrf.mxu0
  %v1153 = vadd.f32 %v1099, %v1152
  %1154 = vmatmul.bf16.gmra.mxu0 %v1059
  %v1155 = vpop.f32.mrf.mxu0
  %v1156 = vadd.f32 %v1102, %v1155
  %v1157 = vpop.f32.mrf.mxu0
  %v1158 = vadd.f32 %v1104, %v1157
  %1159 = vmatmul.bf16.gmra.mxu0 %v1062
  %v1160 = vpop.f32.mrf.mxu0
  %v1161 = vadd.f32 %v1107, %v1160
  %v1162 = vpop.f32.mrf.mxu0
  %v1163 = vadd.f32 %v1109, %v1162
  %1164 = vmatmul.bf16.gmra.mxu0 %v1065
  %v1165 = vpop.f32.mrf.mxu0
  %v1166 = vadd.f32 %v1112, %v1165
  %v1167 = vpop.f32.mrf.mxu0
  %v1168 = vadd.f32 %v1114, %v1167
  %1169 = vmatmul.bf16.gmra.mxu0 %v1068
  %v1170 = vpop.f32.mrf.mxu0
  %v1171 = vadd.f32 %v1117, %v1170
  %v1172 = vpop.f32.mrf.mxu0
  %v1173 = vadd.f32 %v1119, %v1172
  %1174 = vmatmul.bf16.gmra.mxu0 %v1071
  %v1175 = vpop.f32.mrf.mxu0
  %v1176 = vadd.f32 %v1122, %v1175
  %v1177 = vpop.f32.mrf.mxu0
  %v1178 = vadd.f32 %v1124, %v1177
  %1179 = vmatmul.bf16.gmra.mxu0 %v1074
  %v1180 = vpop.f32.mrf.mxu0
  %v1181 = vadd.f32 %v1127, %v1180
  %v1182 = vpop.f32.mrf.mxu0
  %v1183 = vadd.f32 %v1129, %v1182
  %1184 = vmatmul.bf16.gmra.mxu0 %v1077
  %v1185 = vpop.f32.mrf.mxu0
  %v1186 = vadd.f32 %v1132, %v1185
  %v1187 = vpop.f32.mrf.mxu0
  %v1188 = vadd.f32 %v1134, %v1187
  %1189 = vdwg.mxu0
  %v1190 = vmul.f32 %v1146, 0.5
  %v1191 = vmul.f32 %v1148, 0.5
  %v1192 = vmul.f32 %v1151, 0.5
  %v1193 = vmul.f32 %v1153, 0.5
  %v1194 = vmul.f32 %v1156, 0.5
  %v1195 = vmul.f32 %v1158, 0.5
  %v1196 = vmul.f32 %v1161, 0.5
  %v1197 = vmul.f32 %v1163, 0.5
  %v1198 = vmul.f32 %v1166, 0.5
  %v1199 = vmul.f32 %v1168, 0.5
  %v1200 = vmul.f32 %v1171, 0.5
  %v1201 = vmul.f32 %v1173, 0.5
  %v1202 = vmul.f32 %v1176, 0.5
  %v1203 = vmul.f32 %v1178, 0.5
  %v1204 = vmul.f32 %v1181, 0.5
  %v1205 = vmul.f32 %v1183, 0.5
  %v1206 = vmul.f32 %v1186, 0.5
  %v1207 = vmul.f32 %v1188, 0.5
  %v1208 = vtanh.pop %v1190
  %v1209 = vtanh.pop %v1191
  %v1210 = vtanh.pop %v1192
  %v1211 = vtanh.pop %v1193
  %v1212 = vtanh.pop %v1194
  %v1213 = vtanh.pop %v1195
  %v1214 = vtanh.pop %v1196
  %v1215 = vtanh.pop %v1197
  %v1216 = vtanh.pop %v1198
  %v1217 = vtanh.pop %v1199
  %v1218 = vtanh.pop %v1200
  %v1219 = vtanh.pop %v1201
  %v1220 = vtanh.pop %v1202
  %v1221 = vtanh.pop %v1203
  %v1222 = vtanh.pop %v1204
  %v1223 = vtanh.pop %v1205
  %v1224 = vtanh.pop %v1206
  %v1225 = vtanh.pop %v1207
  %v1226 = vadd.f32 %v1208, 1.0
  %v1227 = vadd.f32 %v1209, 1.0
  %v1228 = vadd.f32 %v1210, 1.0
  %v1229 = vadd.f32 %v1211, 1.0
  %v1230 = vadd.f32 %v1212, 1.0
  %v1231 = vadd.f32 %v1213, 1.0
  %v1232 = vadd.f32 %v1214, 1.0
  %v1233 = vadd.f32 %v1215, 1.0
  %v1234 = vadd.f32 %v1216, 1.0
  %v1235 = vadd.f32 %v1217, 1.0
  %v1236 = vadd.f32 %v1218, 1.0
  %v1237 = vadd.f32 %v1219, 1.0
  %v1238 = vadd.f32 %v1220, 1.0
  %v1239 = vadd.f32 %v1221, 1.0
  %v1240 = vadd.f32 %v1222, 1.0
  %v1241 = vadd.f32 %v1223, 1.0
  %v1242 = vadd.f32 %v1224, 1.0
  %v1243 = vadd.f32 %v1225, 1.0
  %v1244 = vmul.f32 %v1226, 0.5
  %v1245 = vmul.f32 %v1227, 0.5
  %v1246 = vmul.f32 %v1228, 0.5
  %v1247 = vmul.f32 %v1229, 0.5
  %v1248 = vmul.f32 %v1230, 0.5
  %v1249 = vmul.f32 %v1231, 0.5
  %v1250 = vmul.f32 %v1232, 0.5
  %v1251 = vmul.f32 %v1233, 0.5
  %v1252 = vmul.f32 %v1234, 0.5
  %v1253 = vmul.f32 %v1235, 0.5
  %v1254 = vmul.f32 %v1236, 0.5
  %v1255 = vmul.f32 %v1237, 0.5
  %v1256 = vmul.f32 %v1238, 0.5
  %v1257 = vmul.f32 %v1239, 0.5
  %v1258 = vmul.f32 %v1240, 0.5
  %v1259 = vmul.f32 %v1241, 0.5
  %v1260 = vmul.f32 %v1242, 0.5
  %v1261 = vmul.f32 %v1243, 0.5
  %v1262 = vld [vmem:[%s7] sm:$0x3]
  %v1263 = vpack.c.bf16 %v1245, %v1244
  %v1264 = vpack.c.bf16 %v1247, %v1246
  %v1265 = vpack.c.bf16 %v1249, %v1248
  %v1266 = vpack.c.bf16 %v1251, %v1250
  %v1267 = vpack.c.bf16 %v1253, %v1252
  %v1268 = vpack.c.bf16 %v1255, %v1254
  %v1269 = vpack.c.bf16 %v1257, %v1256
  %v1270 = vpack.c.bf16 %v1259, %v1258
  %v1271 = vpack.c.bf16 %v1261, %v1260
  %v1272 = vld [vmem:[#allocation2] sm:$0x1]
  %1274 = vset.pattern.permute.xlu0 0
  %1275 = vperm.xlu0 %1274, %v1272
  %v1276 = vpop.permute.xlu0 %1275
  %v1278 = vperm.slane %v1276, 0
  %1280 = vst [vmem:[#allocation1] ss:$9 sm:$0xff] %v1262
  %v1281 = vld [vmem:[#allocation1] sm:$0xff]
  %v1282 = vld [vmem:[#allocation1 + $0x9] sm:$0xff]
  %v1284 = vsel %vm624, %v1282, 0
  %v1287 = vsel %vm652, %v1271, 0
  %1289 = vmatpush.bf16.msra.mxu0 %v1270
  %1290 = vmatpush.bf16.msra.mxu0 %v1269
  %1291 = vmatpush.bf16.msra.mxu0 %v1268
  %1292 = vmatpush.bf16.msra.mxu0 %v1267
  %1293 = vmatpush.bf16.msra.mxu0 %v1266
  %1294 = vmatpush.bf16.msra.mxu0 %v1265
  %1295 = vmatpush.bf16.msra.mxu0 %v1264
  %1296 = vmatpush.bf16.msra.mxu0 %v1263
  %1297 = vmatmul.bf16.gmra.mxu0 %v1281
  %v1298 = vpop.f32.mrf.mxu0
  %v1299 = vadd.f32 %v1278, %v1298
  %v1300 = vpop.f32.mrf.mxu0
  %1301 = vdwg.mxu0
  %1302 = vmatpush.bf16.msra.mxu0 0
  %1303 = vmatpush.bf16.msra.mxu0 0
  %1304 = vmatpush.bf16.msra.mxu0 0
  %1305 = vmatpush.bf16.msra.mxu0 0
  %1306 = vmatpush.bf16.msra.mxu0 0
  %1307 = vmatpush.bf16.msra.mxu0 0
  %1308 = vmatpush.bf16.msra.mxu0 0
  %1309 = vmatpush.bf16.msra.mxu0 %v1287
  %1310 = vmatmul.bf16.gmra.mxu0 %v1284
  %v1311 = vpop.f32.mrf.mxu0
  %v1312 = vadd.f32 %v1299, %v1311
  %v1313 = vpop.f32.mrf.mxu0
  %1314 = vdwg.mxu0
  %v1315 = vmul.f32 %v1312, 0.5
  %v1316 = vtanh.pop %v1315
  %v1317 = vadd.f32 %v1316, 1.0
  %v1318 = vmul.f32 %v1317, 0.5
  %1319 = vst [vmem:[%s9] sm:$0x1] %v1318
  // Predicated region
  $region38: #{net_forward.1} parent=0 // pred_check
    _
  $region39: #{net_forward.1} parent=0 // pred_check_branch
    %1321 = sbr.rel (0) target = $region41
  $region40: #{net_forward.1} parent=0 // pred_region
    _
  $region41: #{net_forward.1} parent=0 // pred_fallthru
    _
  // Predicated region
  $region42: #{net_forward.1} parent=0 // pred_check
    _
  $region43: #{net_forward.1} parent=0 // pred_check_branch
    %1323 = sbr.rel (0) target = $region45
  $region44: #{net_forward.1} parent=0 // pred_region
    _
  $region45: #{net_forward.1} parent=0 // pred_fallthru
    _

</llo_original>
